<compile_context>
chip_gen: v7x
topology: tpu7x:2x2x1
jax: 0.10.0
libtpu: 0.0.40
codegen_flags: <defaults>
</compile_context>

<pallas_src>
import functools

import jax
import jax.numpy as jnp
from jax.experimental import pallas as pl
from jax.experimental.pallas import tpu as pltpu


def _round_up(v, m):
    return (v + m - 1) // m * m


# ---------------------------------------------------------------------------
# Kernels
# ---------------------------------------------------------------------------
def _pooled_readout_kernel(batch_ref, x_ref, w_ref, b_ref, o_ref,
                           acc_ref, cnt_ref):
    # batch_ref: (1, TN) int32       graph id per node (-1 for padded nodes)
    # x_ref:     (TN, H_pad)         node features, native dtype (bf16/f32)
    # w_ref:     (H_pad, O_pad)      linear weight, pre-transposed + zero padded
    # b_ref:     (1, O_pad)          linear bias, zero padded
    # o_ref:     (TG, O_pad)         per-graph output tile
    # acc_ref:   (TG, H_pad) f32     segment-sum accumulator (VMEM scratch)
    # cnt_ref:   (TG, 128)  f32      per-graph node counts  (VMEM scratch)
    gi = pl.program_id(0)
    ni = pl.program_id(1)
    nk = pl.num_programs(1)

    @pl.when(ni == 0)
    def _():
        acc_ref[...] = jnp.zeros_like(acc_ref)
        cnt_ref[...] = jnp.zeros_like(cnt_ref)

    tg = acc_ref.shape[0]
    tn = x_ref.shape[0]

    # Per-tile one-hot (TG, TN); never materialize the full (G, N) matrix.
    gids = jax.lax.broadcasted_iota(jnp.int32, (tg, tn), 0) + gi * tg
    oh_bool = gids == batch_ref[...]
    onehot = oh_bool.astype(x_ref.dtype)          # native-dtype MXU operands

    # Segment sums on the MXU with f32 accumulation.
    acc_ref[...] += jnp.dot(onehot, x_ref[...],
                            preferred_element_type=jnp.float32)
    # Node counts via a lane reduce (XLU slack); padded nodes never match.
    cnt_ref[...] = cnt_ref[...] + jnp.sum(
        oh_bool.astype(jnp.float32), axis=-1, keepdims=True)

    @pl.when(ni == nk - 1)
    def _():
        counts = cnt_ref[:, 0:1]                              # static slice
        inv = pl.reciprocal(jnp.maximum(counts, 1.0), approx=False)
        seg_mean = (acc_ref[...] * inv).astype(w_ref.dtype)   # (TG, H_pad)
        y = jnp.dot(seg_mean, w_ref[...],
                    preferred_element_type=jnp.float32)
        o_ref[...] = (y + b_ref[...]).astype(o_ref.dtype)


def _linear_kernel(x_ref, w_ref, b_ref, o_ref):
    # batch=None path: plain row-tiled Linear (weight/bias stay resident).
    y = jnp.dot(x_ref[...], w_ref[...], preferred_element_type=jnp.float32)
    o_ref[...] = (y + b_ref[...]).astype(o_ref.dtype)


def _maybe_vmem_limit(bytes_needed):
    # Only bump above the scoped default (16 MiB on v5e) when the tiles need
    # it; cap well under v7x's 64 MiB physical VMEM.
    if bytes_needed > 12 * 2**20:
        return int(min(2 * bytes_needed, 60 * 2**20))
    return None


# ---------------------------------------------------------------------------
# Wrappers
# ---------------------------------------------------------------------------
@functools.partial(jax.jit, static_argnames=("num_graphs", "node_tile", "graph_tile"))
def readout_head_pooled(x, batch, weight, bias, *, num_graphs,
                        node_tile=1024, graph_tile=None):
    """scatter(x, batch, dim=0, reduce='mean') followed by Linear."""
    N, H = x.shape
    O = weight.shape[0]

    h_pad = _round_up(H, 128)
    o_pad = _round_up(O, 128)
    tn = min(node_tile, _round_up(N, 128))       # main sweep knob
    n_pad = _round_up(N, tn)
    if graph_tile is None:
        # One graph tile for G <= 2048 so x is streamed from HBM only once.
        graph_tile = min(_round_up(num_graphs, 8), 2048)
    tg = graph_tile
    g_pad = _round_up(num_graphs, tg)

    # Single fused pads; native dtypes preserved (bf16 stays bf16).
    x_pad = jnp.pad(x, ((0, n_pad - N), (0, h_pad - H)))
    batch_pad = jnp.pad(batch.astype(jnp.int32), (0, n_pad - N),
                        constant_values=-1)[None, :]
    w_pad = jnp.pad(weight.T, ((0, h_pad - H), (0, o_pad - O)))
    b_pad = jnp.pad(bias, (0, o_pad - O))[None, :]

    vmem_bytes = (2 * tn * h_pad * x_pad.dtype.itemsize     # x (double-buffered)
                  + 2 * tn * 4                               # batch ids
                  + 2 * h_pad * o_pad * w_pad.dtype.itemsize # weight
                  + 2 * o_pad * b_pad.dtype.itemsize         # bias
                  + tg * h_pad * 4 + tg * 128 * 4            # acc + counts scratch
                  + 2 * tg * o_pad * 4)                      # output tile

    out = pl.pallas_call(
        _pooled_readout_kernel,
        out_shape=jax.ShapeDtypeStruct((g_pad, o_pad), x.dtype),
        grid_spec=pltpu.PrefetchScalarGridSpec(
            num_scalar_prefetch=0,
            grid=(g_pad // tg, n_pad // tn),
            in_specs=[
                pl.BlockSpec((1, tn), lambda g, n: (0, n)),
                pl.BlockSpec((tn, h_pad), lambda g, n: (n, 0)),
                pl.BlockSpec((h_pad, o_pad), lambda g, n: (0, 0)),
                pl.BlockSpec((1, o_pad), lambda g, n: (0, 0)),
            ],
            out_specs=pl.BlockSpec((tg, o_pad), lambda g, n: (g, 0)),
            scratch_shapes=[
                pltpu.VMEM((tg, h_pad), jnp.float32),
                pltpu.VMEM((tg, 128), jnp.float32),
            ],
        ),
        compiler_params=pltpu.CompilerParams(
            dimension_semantics=("parallel", "arbitrary"),
            vmem_limit_bytes=_maybe_vmem_limit(vmem_bytes)),
    )(batch_pad, x_pad, w_pad, b_pad)
    return out[:num_graphs, :O]


@functools.partial(jax.jit, static_argnames=("node_tile",))
def readout_head_no_batch(x, weight, bias, *, node_tile=1024):
    """batch=None path: just the Linear layer, tiled over rows."""
    N, H = x.shape
    O = weight.shape[0]
    h_pad = _round_up(H, 128)
    o_pad = _round_up(O, 128)
    tn = min(node_tile, _round_up(N, 128))
    n_pad = _round_up(N, tn)

    x_pad = jnp.pad(x, ((0, n_pad - N), (0, h_pad - H)))
    w_pad = jnp.pad(weight.T, ((0, h_pad - H), (0, o_pad - O)))
    b_pad = jnp.pad(bias, (0, o_pad - O))[None, :]

    vmem_bytes = (2 * tn * h_pad * x_pad.dtype.itemsize
                  + 2 * h_pad * o_pad * w_pad.dtype.itemsize
                  + 2 * o_pad * b_pad.dtype.itemsize
                  + 2 * tn * o_pad * x_pad.dtype.itemsize)

    out = pl.pallas_call(
        _linear_kernel,
        out_shape=jax.ShapeDtypeStruct((n_pad, o_pad), x.dtype),
        grid_spec=pltpu.PrefetchScalarGridSpec(
            num_scalar_prefetch=0,
            grid=(n_pad // tn,),
            in_specs=[
                pl.BlockSpec((tn, h_pad), lambda i: (i, 0)),
                pl.BlockSpec((h_pad, o_pad), lambda i: (0, 0)),
                pl.BlockSpec((1, o_pad), lambda i: (0, 0)),
            ],
            out_specs=pl.BlockSpec((tn, o_pad), lambda i: (i, 0)),
        ),
        compiler_params=pltpu.CompilerParams(
            dimension_semantics=("parallel",),
            vmem_limit_bytes=_maybe_vmem_limit(vmem_bytes)),
    )(x_pad, w_pad, b_pad)
    return out[:N, :O]


# ---------------------------------------------------------------------------
# Pure-JAX reference (mirrors the PyTorch forward)
# ---------------------------------------------------------------------------
def readout_head_ref(x, batch, weight, bias, num_graphs):
    if batch is not None:
        seg_sum = jax.ops.segment_sum(x, batch, num_segments=num_graphs)
        counts = jax.ops.segment_sum(
            jnp.ones((x.shape[0],), x.dtype), batch, num_segments=num_graphs)
        x = seg_sum / jnp.maximum(counts, 1.0)[:, None]
    return x @ weight.T + bias


if __name__ == "__main__":
    key = jax.random.PRNGKey(0)
    k_x, k_w, k_b = jax.random.split(key, 3)

    # Small shapes: N=8 nodes, hidden=32, output=16, 2 graphs.
    N, H, O, G = 8, 32, 16, 2
    x = jax.random.normal(k_x, (N, H), dtype=jnp.float32)
    batch = jnp.array([0, 0, 0, 1, 1, 1, 1, 1], dtype=jnp.int32)

    # Deterministic nn.Linear(hidden_dim=H, output_dim=O) parameters.
    bound = 1.0 / (H ** 0.5)
    weight = jax.random.uniform(k_w, (O, H), jnp.float32, -bound, bound)
    bias = jax.random.uniform(k_b, (O,), jnp.float32, -bound, bound)

    # Pooled path (batch provided).
    out_pooled = readout_head_pooled(x, batch, weight, bias, num_graphs=G)
    out_pooled = jax.block_until_ready(out_pooled)
    ref_pooled = readout_head_ref(x, batch, weight, bias, G)
    assert out_pooled.shape == (G, O)
    assert jnp.allclose(out_pooled, ref_pooled, atol=1e-5, rtol=1e-5)

    # batch=None path (plain Linear).
    out_lin = readout_head_no_batch(x, weight, bias)
    out_lin = jax.block_until_ready(out_lin)
    ref_lin = readout_head_ref(x, None, weight, bias, G)
    assert out_lin.shape == (N, O)
    assert jnp.allclose(out_lin, ref_lin, atol=1e-5, rtol=1e-5)

    print("KERNEL_OK")
</pallas_src>

<mosaic_0001>
module attributes {stable_mosaic.version = 11 : i64} {
  func.func @_pooled_readout_kernel(%arg0: i32, %arg1: i32, %arg2: memref<1x128xi32, #tpu.memory_space<vmem>>, %arg3: memref<128x128xf32, #tpu.memory_space<vmem>>, %arg4: memref<128x128xf32, #tpu.memory_space<vmem>>, %arg5: memref<1x128xf32, #tpu.memory_space<vmem>>, %arg6: memref<8x128xf32, #tpu.memory_space<vmem>>, %arg7: memref<8x128xf32, #tpu.memory_space<vmem>>, %arg8: memref<8x128xf32, #tpu.memory_space<vmem>>) attributes {dimension_semantics = [#tpu.dimension_semantics<parallel>, #tpu.dimension_semantics<arbitrary>], iteration_bounds = array<i64: 1, 1>, scalar_prefetch = 0 : i64, scratch_operands = 2 : i64, tpu.core_type = #tpu.core_type<tc>, window_params = [{transform_indices = @transform_0, window_bounds = array<i64: 1, 128>}, {transform_indices = @transform_1, window_bounds = array<i64: 128, 128>}, {pipeline_mode = #tpu.pipeline_mode<synchronous>, transform_indices = @transform_2, window_bounds = array<i64: 128, 128>}, {pipeline_mode = #tpu.pipeline_mode<synchronous>, transform_indices = @transform_3, window_bounds = array<i64: 1, 128>}, {transform_indices = @transform_4, window_bounds = array<i64: 8, 128>}]} {
    %c0_i32 = arith.constant 0 : i32
    %0 = arith.cmpi eq, %arg1, %c0_i32 : i32
    %1 = arith.extui %0 : i1 to i32
    %c0_i32_0 = arith.constant 0 : i32
    %2 = arith.cmpi ne, %1, %c0_i32_0 : i32
    scf.if %2 {
      %cst_15 = arith.constant 0.000000e+00 : f32
      %28 = vector.broadcast %cst_15 : f32 to vector<8x128xf32>
      %c0_16 = arith.constant 0 : index
      %c0_17 = arith.constant 0 : index
      %29 = vector.load %arg7[%c0_16, %c0_17] : memref<8x128xf32, #tpu.memory_space<vmem>>, vector<8x128xf32>
      tpu.vector_store %arg7[%c0_16, %c0_17], %28 {strides = array<i32>} : memref<8x128xf32, #tpu.memory_space<vmem>>, vector<8x128xf32>,
      %cst_18 = arith.constant 0.000000e+00 : f32
      %30 = vector.broadcast %cst_18 : f32 to vector<8x128xf32>
      %c0_19 = arith.constant 0 : index
      %c0_20 = arith.constant 0 : index
      %31 = vector.load %arg8[%c0_19, %c0_20] : memref<8x128xf32, #tpu.memory_space<vmem>>, vector<8x128xf32>
      tpu.vector_store %arg8[%c0_19, %c0_20], %30 {strides = array<i32>} : memref<8x128xf32, #tpu.memory_space<vmem>>, vector<8x128xf32>,
    } else {
    }
    %3 = tpu.iota {dimensions = array<i32: 0>} : vector<8x128xi32>
    %c8_i32 = arith.constant 8 : i32
    %4 = arith.muli %arg0, %c8_i32 : i32
    %5 = vector.broadcast %4 : i32 to vector<8x128xi32>
    %6 = arith.addi %3, %5 : vector<8x128xi32>
    %c0 = arith.constant 0 : index
    %c0_1 = arith.constant 0 : index
    %7 = vector.load %arg2[%c0, %c0_1] : memref<1x128xi32, #tpu.memory_space<vmem>>, vector<1x128xi32>
    %8 = vector.broadcast %7 : vector<1x128xi32> to vector<8x128xi32>
    %9 = arith.cmpi eq, %6, %8 : vector<8x128xi32>
    %10 = arith.extui %9 : vector<8x128xi1> to vector<8x128xi32>
    %11 = arith.sitofp %10 : vector<8x128xi32> to vector<8x128xf32>
    %c0_2 = arith.constant 0 : index
    %c0_3 = arith.constant 0 : index
    %12 = vector.load %arg7[%c0_2, %c0_3] : memref<8x128xf32, #tpu.memory_space<vmem>>, vector<8x128xf32>
    %c0_4 = arith.constant 0 : index
    %c0_5 = arith.constant 0 : index
    %13 = vector.load %arg3[%c0_4, %c0_5] : memref<128x128xf32, #tpu.memory_space<vmem>>, vector<128x128xf32>
    %cst = arith.constant dense<0.000000e+00> : vector<8x128xf32>
    %14 = tpu.matmul %11, %13, %cst {dimension_numbers = #tpu.dot_dimension_numbers<[1], [0], [0], [1], [0, 0, 1, 1], [], []>} : vector<8x128xf32>, vector<128x128xf32>, vector<8x128xf32> -> vector<8x128xf32>
    %15 = arith.addf %12, %14 : vector<8x128xf32>
    %c0_6 = arith.constant 0 : index
    %c0_7 = arith.constant 0 : index
    %16 = vector.load %arg7[%c0_6, %c0_7] : memref<8x128xf32, #tpu.memory_space<vmem>>, vector<8x128xf32>
    tpu.vector_store %arg7[%c0_6, %c0_7], %15 {strides = array<i32>} : memref<8x128xf32, #tpu.memory_space<vmem>>, vector<8x128xf32>,
    %c0_8 = arith.constant 0 : index
    %c0_9 = arith.constant 0 : index
    %17 = vector.load %arg8[%c0_8, %c0_9] : memref<8x128xf32, #tpu.memory_space<vmem>>, vector<8x128xf32>
    %18 = arith.extui %9 : vector<8x128xi1> to vector<8x128xi32>
    %19 = arith.sitofp %18 : vector<8x128xi32> to vector<8x128xf32>
    %cst_10 = arith.constant dense<0.000000e+00> : vector<8xf32>
    %20 = vector.multi_reduction <add>, %19, %cst_10 [1] : vector<8x128xf32> to vector<8xf32>
    %21 = vector.shape_cast %20 : vector<8xf32> to vector<8x1xf32>
    %22 = vector.broadcast %21 : vector<8x1xf32> to vector<8x128xf32>
    %23 = arith.addf %17, %22 : vector<8x128xf32>
    %c0_11 = arith.constant 0 : index
    %c0_12 = arith.constant 0 : index
    %24 = vector.load %arg8[%c0_11, %c0_12] : memref<8x128xf32, #tpu.memory_space<vmem>>, vector<8x128xf32>
    tpu.vector_store %arg8[%c0_11, %c0_12], %23 {strides = array<i32>} : memref<8x128xf32, #tpu.memory_space<vmem>>, vector<8x128xf32>,
    %c0_i32_13 = arith.constant 0 : i32
    %25 = arith.cmpi eq, %arg1, %c0_i32_13 : i32
    %26 = arith.extui %25 : i1 to i32
    %c0_i32_14 = arith.constant 0 : i32
    %27 = arith.cmpi ne, %26, %c0_i32_14 : i32
    scf.if %27 {
      %c0_15 = arith.constant 0 : index
      %c0_16 = arith.constant 0 : index
      %28 = vector.load %arg8[%c0_15, %c0_16] : memref<8x128xf32, #tpu.memory_space<vmem>>, vector<8x1xf32>
      %cst_17 = arith.constant 1.000000e+00 : f32
      %29 = vector.broadcast %cst_17 : f32 to vector<8x1xf32>
      %30 = arith.maximumf %28, %29 : vector<8x1xf32>
      %31 = tpu.reciprocal %30 : vector<8x1xf32> -> vector<8x1xf32>
      %c0_18 = arith.constant 0 : index
      %c0_19 = arith.constant 0 : index
      %32 = vector.load %arg7[%c0_18, %c0_19] : memref<8x128xf32, #tpu.memory_space<vmem>>, vector<8x128xf32>
      %33 = vector.broadcast %31 : vector<8x1xf32> to vector<8x128xf32>
      %34 = arith.mulf %32, %33 : vector<8x128xf32>
      %c0_20 = arith.constant 0 : index
      %c0_21 = arith.constant 0 : index
      %35 = vector.load %arg4[%c0_20, %c0_21] : memref<128x128xf32, #tpu.memory_space<vmem>>, vector<128x128xf32>
      %cst_22 = arith.constant dense<0.000000e+00> : vector<8x128xf32>
      %36 = tpu.matmul %34, %35, %cst_22 {dimension_numbers = #tpu.dot_dimension_numbers<[1], [0], [0], [1], [0, 0, 1, 1], [], []>} : vector<8x128xf32>, vector<128x128xf32>, vector<8x128xf32> -> vector<8x128xf32>
      %c0_23 = arith.constant 0 : index
      %c0_24 = arith.constant 0 : index
      %37 = vector.load %arg5[%c0_23, %c0_24] : memref<1x128xf32, #tpu.memory_space<vmem>>, vector<1x128xf32>
      %38 = vector.broadcast %37 : vector<1x128xf32> to vector<8x128xf32>
      %39 = arith.addf %36, %38 : vector<8x128xf32>
      %c0_25 = arith.constant 0 : index
      %c0_26 = arith.constant 0 : index
      %40 = vector.load %arg6[%c0_25, %c0_26] : memref<8x128xf32, #tpu.memory_space<vmem>>, vector<8x128xf32>
      tpu.vector_store %arg6[%c0_25, %c0_26], %39 {strides = array<i32>} : memref<8x128xf32, #tpu.memory_space<vmem>>, vector<8x128xf32>,
    } else {
    }
    return
  }
  func.func @transform_0(%arg0: i32, %arg1: i32) -> (i32, i32) {
    %c0_i32 = arith.constant 0 : i32
    %c0_i32_0 = arith.constant 0 : i32
    return %c0_i32, %arg1 : i32, i32
  }
  func.func @transform_1(%arg0: i32, %arg1: i32) -> (i32, i32) {
    %c0_i32 = arith.constant 0 : i32
    %c0_i32_0 = arith.constant 0 : i32
    return %arg1, %c0_i32 : i32, i32
  }
  func.func @transform_2(%arg0: i32, %arg1: i32) -> (i32, i32) {
    %c0_i32 = arith.constant 0 : i32
    %c0_i32_0 = arith.constant 0 : i32
    %c0_i32_1 = arith.constant 0 : i32
    return %c0_i32, %c0_i32_0 : i32, i32
  }
  func.func @transform_3(%arg0: i32, %arg1: i32) -> (i32, i32) {
    %c0_i32 = arith.constant 0 : i32
    %c0_i32_0 = arith.constant 0 : i32
    %c0_i32_1 = arith.constant 0 : i32
    return %c0_i32, %c0_i32_0 : i32, i32
  }
  func.func @transform_4(%arg0: i32, %arg1: i32) -> (i32, i32) {
    %c0_i32 = arith.constant 0 : i32
    %c0_i32_0 = arith.constant 0 : i32
    return %arg0, %c0_i32 : i32, i32
  }
}

</mosaic_0001>

<llo_original>
// kernel: readout_head_pooled.1
$region0: #{readout_head_pooled.1}
  #allocation0 [shape = 'u32[]', space=smem, size = 0x4, offset = 0x4, fixed_abs, tag = 'smem constant byte address 0x4 - core index']
  #allocation1 [shape = 'u32[144,128]{1,0:T(1,128)}', space=vmem, size = 0x12000, scoped, tag = 'internal scratch']
  #allocation2 [shape = 'f32[8,128]{1,0:T(8,128)}', space=vmem, size = 0x1000, scoped, tag = 'scratch operand']
  #allocation3 [shape = 'f32[8,128]{1,0:T(8,128)}', space=vmem, size = 0x1000, scoped, tag = 'scratch operand']
  %s0 = inlined_call_operand.vmem [shape: s32[1,128], index: 0, kind: input, shape index: {}]
  %s1 = inlined_call_operand.vmem [shape: f32[128,128], index: 1, kind: input, shape index: {}]
  %s2 = inlined_call_operand.vmem [shape: f32[128,128], index: 2, kind: input, shape index: {}]
  %s3 = inlined_call_operand.vmem [shape: f32[1,128], index: 3, kind: input, shape index: {}]
  %s4 = inlined_call_operand.vmem [shape: f32[8,128], index: 4, kind: output, shape index: {}]
  %s5 = sld [smem:[#allocation0]]
  $region34: #{readout_head_pooled.1} parent=0
    _
  %s7 = ssub.s32 1, %s5
  %s8 = scalar_select 0, %s7, %s5
  // Predicated region
  $region2: #{readout_head_pooled.1} parent=0 // pred_check
    _
  $region3: #{readout_head_pooled.1} parent=0 // pred_check_branch
    %10 = sbr.rel (0) target = $region5
  $region4: #{readout_head_pooled.1} parent=0 // pred_region
    _
  $region5: #{readout_head_pooled.1} parent=0 // pred_fallthru
    _
  // Predicated region
  $region6: #{readout_head_pooled.1} parent=0 // pred_check
    _
  $region7: #{readout_head_pooled.1} parent=0 // pred_check_branch
    %12 = sbr.rel (0) target = $region9
  $region8: #{readout_head_pooled.1} parent=0 // pred_region
    _
  $region9: #{readout_head_pooled.1} parent=0 // pred_fallthru
    _
  // Predicated region
  $region10: #{readout_head_pooled.1} parent=0 // pred_check
    _
  $region11: #{readout_head_pooled.1} parent=0 // pred_check_branch
    %14 = sbr.rel (0) target = $region13
  $region12: #{readout_head_pooled.1} parent=0 // pred_region
    _
  $region13: #{readout_head_pooled.1} parent=0 // pred_fallthru
    _
  // Predicated region
  $region14: #{readout_head_pooled.1} parent=0 // pred_check
    _
  $region15: #{readout_head_pooled.1} parent=0 // pred_check_branch
    %16 = sbr.rel (0) target = $region17
  $region16: #{readout_head_pooled.1} parent=0 // pred_region
    _
  $region17: #{readout_head_pooled.1} parent=0 // pred_fallthru
    _
  %p17 = scmp.eq.s32.totalorder 0, 0
  // Predicated region
  $region18: #{readout_head_pooled.1} parent=0 // pred_check
    %p18 = pneg %p17
  $region19: #{readout_head_pooled.1} parent=0 // pred_check_branch
    %20 = sbr.rel (%p18) target = $region21
  $region20: #{readout_head_pooled.1} parent=0 // pred_region
    %21 = vst [vmem:[#allocation2] sm:$0xff] 0.0
    %22 = vst [vmem:[#allocation3] sm:$0xff] 0.0
  $region21: #{readout_head_pooled.1} parent=0 // pred_fallthru
    _
  %v23 = vlaneseq
  %v24 = vshrl.u32 %v23, 7
  %s25 = smul.u32 0, 8
  %v26 = vstv %s25
  %v27 = vadd.s32 %v24, %v26
  %v28 = vld [vmem:[%s0] sm:$0x1]
  %v29 = vlaneseq
  %v30 = vshrl.u32 %v29, 7
  %v31 = vsub.s32 0, %v30
  %v32 = vrot.slane %v28, %v31
  %vm33 = vcmp.eq.s32.totalorder %v27, %v32
  %v34 = vsel %vm33, 1, 0
  %v35 = vcvt.s32.f32 %v34
  %v36 = vld [vmem:[#allocation2] sm:$0xff]
  %v37 = vld [vmem:[%s1] sm:$0xff]
  %v38 = vld [vmem:[%s1 + $0x8] sm:$0xff]
  %v39 = vld [vmem:[%s1 + $0x10] sm:$0xff]
  %v40 = vld [vmem:[%s1 + $0x18] sm:$0xff]
  %v41 = vld [vmem:[%s1 + $0x20] sm:$0xff]
  %v42 = vld [vmem:[%s1 + $0x28] sm:$0xff]
  %v43 = vld [vmem:[%s1 + $0x30] sm:$0xff]
  %v44 = vld [vmem:[%s1 + $0x38] sm:$0xff]
  %v45 = vld [vmem:[%s1 + $0x40] sm:$0xff]
  %v46 = vld [vmem:[%s1 + $0x48] sm:$0xff]
  %v47 = vld [vmem:[%s1 + $0x50] sm:$0xff]
  %v48 = vld [vmem:[%s1 + $0x58] sm:$0xff]
  %v49 = vld [vmem:[%s1 + $0x60] sm:$0xff]
  %v50 = vld [vmem:[%s1 + $0x68] sm:$0xff]
  %v51 = vld [vmem:[%s1 + $0x70] sm:$0xff]
  %v52 = vld [vmem:[%s1 + $0x78] sm:$0xff]
  %53 = vmatprep.subr.mxu0 0.0
  %54 = vmatpush1.msra.mxu0 %v37
  %55 = vmatprep.subr.mxu0 0.0
  %56 = vmatpush1.msra.mxu0 %v38
  %57 = vmatprep.subr.mxu0 0.0
  %58 = vmatpush1.msra.mxu0 %v39
  %59 = vmatprep.subr.mxu0 0.0
  %60 = vmatpush1.msra.mxu0 %v40
  %61 = vmatprep.subr.mxu0 0.0
  %62 = vmatpush1.msra.mxu0 %v41
  %63 = vmatprep.subr.mxu0 0.0
  %64 = vmatpush1.msra.mxu0 %v42
  %65 = vmatprep.subr.mxu0 0.0
  %66 = vmatpush1.msra.mxu0 %v43
  %67 = vmatprep.subr.mxu0 0.0
  %68 = vmatpush1.msra.mxu0 %v44
  %69 = vmatprep.subr.mxu0 0.0
  %70 = vmatpush1.msra.mxu0 %v45
  %71 = vmatprep.subr.mxu0 0.0
  %72 = vmatpush1.msra.mxu0 %v46
  %73 = vmatprep.subr.mxu0 0.0
  %74 = vmatpush1.msra.mxu0 %v47
  %75 = vmatprep.subr.mxu0 0.0
  %76 = vmatpush1.msra.mxu0 %v48
  %77 = vmatprep.subr.mxu0 0.0
  %78 = vmatpush1.msra.mxu0 %v49
  %79 = vmatprep.subr.mxu0 0.0
  %80 = vmatpush1.msra.mxu0 %v50
  %81 = vmatprep.subr.mxu0 0.0
  %82 = vmatpush1.msra.mxu0 %v51
  %83 = vmatprep.subr.mxu0 0.0
  %84 = vmatpush1.msra.mxu0 %v52
  %85 = vmatprep.subr.mxu0 0.0
  %86 = vmatpush1.msra.mxu0 0.0
  %87 = vmatprep.subr.mxu0 0.0
  %88 = vmatpush1.msra.mxu0 0.0
  %89 = vmatprep.subr.mxu0 0.0
  %90 = vmatpush1.msra.mxu0 0.0
  %91 = vmatprep.subr.mxu0 0.0
  %92 = vmatpush1.msra.mxu0 0.0
  %93 = vmatprep.subr.mxu0 0.0
  %94 = vmatpush1.msra.mxu0 0.0
  %95 = vmatprep.subr.mxu0 0.0
  %96 = vmatpush1.msra.mxu0 0.0
  %97 = vmatprep.subr.mxu0 0.0
  %98 = vmatpush1.msra.mxu0 0.0
  %99 = vmatprep.subr.mxu0 0.0
  %100 = vmatpush1.msra.mxu0 0.0
  %101 = vmatprep.subr.mxu0 0.0
  %102 = vmatpush1.msra.mxu0 0.0
  %103 = vmatprep.subr.mxu0 0.0
  %104 = vmatpush1.msra.mxu0 0.0
  %105 = vmatprep.subr.mxu0 0.0
  %106 = vmatpush1.msra.mxu0 0.0
  %107 = vmatprep.subr.mxu0 0.0
  %108 = vmatpush1.msra.mxu0 0.0
  %109 = vmatprep.subr.mxu0 0.0
  %110 = vmatpush1.msra.mxu0 0.0
  %111 = vmatprep.subr.mxu0 0.0
  %112 = vmatpush1.msra.mxu0 0.0
  %113 = vmatprep.subr.mxu0 0.0
  %114 = vmatpush1.msra.mxu0 0.0
  %115 = vmatprep.subr.mxu0 0.0
  %116 = vmatpush1.msra.mxu0 0.0
  %117 = vmatprep.mubr.f32.mxu0 0.0
  %118 = vmatmul.mubr.f32.gmra.mrb[0].mxu0 %v35
  %v119 = vpop.f32.mrb[0].mxu0
  %v120 = vadd.f32 0.0, %v119
  %v121 = vpop.f32.mrb[0].mxu0
  %122 = vdwg.mxu0
  %v123 = vadd.f32 %v36, %v120
  %124 = vst [vmem:[#allocation2] sm:$0xff] %v123
  %v125 = vld [vmem:[#allocation3] sm:$0xff]
  %126 = vadd.xlane.f32.xlu0 %v35
  %v127 = vpop.xlane.xlu0 %126
  %v128 = vadd.f32 %v125, %v127
  %129 = vst [vmem:[#allocation3] sm:$0xff] %v128
  // Predicated region
  $region22: #{readout_head_pooled.1} parent=0 // pred_check
    %p130 = pneg %p17
  $region23: #{readout_head_pooled.1} parent=0 // pred_check_branch
    %132 = sbr.rel (%p130) target = $region25
  $region24: #{readout_head_pooled.1} parent=0 // pred_region
    %v133 = vld [vmem:[#allocation3] sm:$0xff]
    %v134 = vmax.f32 %v133, 1.0
    %v135 = vrcp.pop %v134
    %v136 = vld [vmem:[#allocation2] sm:$0xff]
    %138 = vset.pattern.permute.xlu0 0
    %139 = vperm.xlu0 %138, %v135
    %v140 = vpop.permute.xlu0 %139
    %v142 = vmul.f32 %v136, %v140
    %v143 = vld [vmem:[%s2] sm:$0xff]
    %v144 = vld [vmem:[%s2 + $0x8] sm:$0xff]
    %v145 = vld [vmem:[%s2 + $0x10] sm:$0xff]
    %v146 = vld [vmem:[%s2 + $0x18] sm:$0xff]
    %v147 = vld [vmem:[%s2 + $0x20] sm:$0xff]
    %v148 = vld [vmem:[%s2 + $0x28] sm:$0xff]
    %v149 = vld [vmem:[%s2 + $0x30] sm:$0xff]
    %v150 = vld [vmem:[%s2 + $0x38] sm:$0xff]
    %v151 = vld [vmem:[%s2 + $0x40] sm:$0xff]
    %v152 = vld [vmem:[%s2 + $0x48] sm:$0xff]
    %v153 = vld [vmem:[%s2 + $0x50] sm:$0xff]
    %v154 = vld [vmem:[%s2 + $0x58] sm:$0xff]
    %v155 = vld [vmem:[%s2 + $0x60] sm:$0xff]
    %v156 = vld [vmem:[%s2 + $0x68] sm:$0xff]
    %v157 = vld [vmem:[%s2 + $0x70] sm:$0xff]
    %v158 = vld [vmem:[%s2 + $0x78] sm:$0xff]
    %v159 = vld [vmem:[%s3] sm:$0x1]
    %v161 = vlaneseq
    %v162 = vshrl.u32 %v161, 7
    %v163 = vsub.s32 0, %v162
    %v164 = vrot.slane %v159, %v163
    %166 = vmatprep.subr.mxu0 0.0
    %167 = vmatpush1.msra.mxu0 %v143
    %168 = vmatprep.subr.mxu0 0.0
    %169 = vmatpush1.msra.mxu0 %v144
    %170 = vmatprep.subr.mxu0 0.0
    %171 = vmatpush1.msra.mxu0 %v145
    %172 = vmatprep.subr.mxu0 0.0
    %173 = vmatpush1.msra.mxu0 %v146
    %174 = vmatprep.subr.mxu0 0.0
    %175 = vmatpush1.msra.mxu0 %v147
    %176 = vmatprep.subr.mxu0 0.0
    %177 = vmatpush1.msra.mxu0 %v148
    %178 = vmatprep.subr.mxu0 0.0
    %179 = vmatpush1.msra.mxu0 %v149
    %180 = vmatprep.subr.mxu0 0.0
    %181 = vmatpush1.msra.mxu0 %v150
    %182 = vmatprep.subr.mxu0 0.0
    %183 = vmatpush1.msra.mxu0 %v151
    %184 = vmatprep.subr.mxu0 0.0
    %185 = vmatpush1.msra.mxu0 %v152
    %186 = vmatprep.subr.mxu0 0.0
    %187 = vmatpush1.msra.mxu0 %v153
    %188 = vmatprep.subr.mxu0 0.0
    %189 = vmatpush1.msra.mxu0 %v154
    %190 = vmatprep.subr.mxu0 0.0
    %191 = vmatpush1.msra.mxu0 %v155
    %192 = vmatprep.subr.mxu0 0.0
    %193 = vmatpush1.msra.mxu0 %v156
    %194 = vmatprep.subr.mxu0 0.0
    %195 = vmatpush1.msra.mxu0 %v157
    %196 = vmatprep.subr.mxu0 0.0
    %197 = vmatpush1.msra.mxu0 %v158
    %198 = vmatprep.subr.mxu0 0.0
    %199 = vmatpush1.msra.mxu0 0.0
    %200 = vmatprep.subr.mxu0 0.0
    %201 = vmatpush1.msra.mxu0 0.0
    %202 = vmatprep.subr.mxu0 0.0
    %203 = vmatpush1.msra.mxu0 0.0
    %204 = vmatprep.subr.mxu0 0.0
    %205 = vmatpush1.msra.mxu0 0.0
    %206 = vmatprep.subr.mxu0 0.0
    %207 = vmatpush1.msra.mxu0 0.0
    %208 = vmatprep.subr.mxu0 0.0
    %209 = vmatpush1.msra.mxu0 0.0
    %210 = vmatprep.subr.mxu0 0.0
    %211 = vmatpush1.msra.mxu0 0.0
    %212 = vmatprep.subr.mxu0 0.0
    %213 = vmatpush1.msra.mxu0 0.0
    %214 = vmatprep.subr.mxu0 0.0
    %215 = vmatpush1.msra.mxu0 0.0
    %216 = vmatprep.subr.mxu0 0.0
    %217 = vmatpush1.msra.mxu0 0.0
    %218 = vmatprep.subr.mxu0 0.0
    %219 = vmatpush1.msra.mxu0 0.0
    %220 = vmatprep.subr.mxu0 0.0
    %221 = vmatpush1.msra.mxu0 0.0
    %222 = vmatprep.subr.mxu0 0.0
    %223 = vmatpush1.msra.mxu0 0.0
    %224 = vmatprep.subr.mxu0 0.0
    %225 = vmatpush1.msra.mxu0 0.0
    %226 = vmatprep.subr.mxu0 0.0
    %227 = vmatpush1.msra.mxu0 0.0
    %228 = vmatprep.subr.mxu0 0.0
    %229 = vmatpush1.msra.mxu0 0.0
    %230 = vmatprep.mubr.f32.mxu0 0.0
    %231 = vmatmul.mubr.f32.gmra.mrb[0].mxu0 %v142
    %v232 = vpop.f32.mrb[0].mxu0
    %v233 = vadd.f32 %v164, %v232
    %v234 = vpop.f32.mrb[0].mxu0
    %235 = vdwg.mxu0
    %236 = vst [vmem:[%s4] sm:$0xff] %v233
  $region25: #{readout_head_pooled.1} parent=0 // pred_fallthru
    _
  // Predicated region
  $region26: #{readout_head_pooled.1} parent=0 // pred_check
    _
  $region27: #{readout_head_pooled.1} parent=0 // pred_check_branch
    %238 = sbr.rel (0) target = $region29
  $region28: #{readout_head_pooled.1} parent=0 // pred_region
    _
  $region29: #{readout_head_pooled.1} parent=0 // pred_fallthru
    _
  // Predicated region
  $region30: #{readout_head_pooled.1} parent=0 // pred_check
    _
  $region31: #{readout_head_pooled.1} parent=0 // pred_check_branch
    %240 = sbr.rel (0) target = $region33
  $region32: #{readout_head_pooled.1} parent=0 // pred_region
    _
  $region33: #{readout_head_pooled.1} parent=0 // pred_fallthru
    _

</llo_original>
